<compile_context>
chip_gen: v5e
topology: v5e:2x2
jax: 0.10.0
libtpu: 0.0.40
codegen_flags: <defaults>
</compile_context>

<pallas_src>
import jax
import jax.numpy as jnp
from jax.experimental import pallas as pl
from jax.experimental.pallas import tpu as pltpu


def _round_up(x, m):
    return ((x + m - 1) // m) * m


def _leaky_relu(x, slope=0.2):
    return jnp.where(x > 0, x, slope * x)


def _mlp_kernel(x_ref,
                w1_ref, b1_ref,
                w2_ref, b2_ref,
                w3_ref, b3_ref,
                w4_ref, b4_ref,
                o_ref, acc_ref):
    # Grid = (batch tiles, fc1 K tiles).  fc2..fc4 weights/biases are
    # VMEM-resident (constant index_map); fc1 accumulates over the K axis into
    # an f32 scratch, and the rest of the MLP runs on the last K step only.
    k = pl.program_id(1)
    nk = pl.num_programs(1)

    @pl.when(k == 0)
    def _():
        acc_ref[...] = jnp.zeros_like(acc_ref)

    # In-kernel f32 -> bf16 cast (VPU op, hidden under the x-tile DMA).
    # MXU operands are bf16; accumulation is f32.
    x = x_ref[...].astype(jnp.bfloat16)
    acc_ref[...] += jnp.dot(x, w1_ref[...], preferred_element_type=jnp.float32)

    @pl.when(k == nk - 1)
    def _():
        # Dropout(0.5) layers are identity in eval mode.
        h = _leaky_relu(acc_ref[...] + b1_ref[...])
        h = _leaky_relu(jnp.dot(h.astype(jnp.bfloat16), w2_ref[...],
                                preferred_element_type=jnp.float32) + b2_ref[...])
        h = _leaky_relu(jnp.dot(h.astype(jnp.bfloat16), w3_ref[...],
                                preferred_element_type=jnp.float32) + b3_ref[...])
        logits = jnp.dot(h.astype(jnp.bfloat16), w4_ref[...],
                         preferred_element_type=jnp.float32) + b4_ref[...]
        # Sigmoid: exp + exact reciprocal (both hit the EUP slot).
        # Lane-dense (TM, 128) store; only column 0 is the real output.
        o_ref[...] = pl.reciprocal(1.0 + jnp.exp(-logits))


def prepare_params(params):
    """One-time host-side prep (hoisted out of the per-call forward).

    Casts weights to bf16 and zero-pads every hidden / output dim up to a
    multiple of 128 lanes (lane-dense vregs, full-width MXU passes).  Zero
    padding is exact through LeakyReLU, so numerics are unchanged.
    """
    w1, b1 = params["fc1"]
    w2, b2 = params["fc2"]
    w3, b3 = params["fc3"]
    w4, b4 = params["fc4"]
    in_dim, h1 = w1.shape
    h2, h3 = w2.shape[1], w3.shape[1]
    H1 = _round_up(h1, 128)
    H2 = _round_up(h2, 128)
    H3 = _round_up(h3, 128)
    OUT = 128

    def pad_w(w, rows, cols):
        out = jnp.zeros((rows, cols), jnp.bfloat16)
        return out.at[:w.shape[0], :w.shape[1]].set(w.astype(jnp.bfloat16))

    def pad_b(b, cols):
        b = jnp.asarray(b, jnp.float32).reshape(1, -1)
        out = jnp.zeros((1, cols), jnp.float32)
        return out.at[:, :b.shape[1]].set(b)

    return dict(
        in_dim=in_dim, dims=(H1, H2, H3, OUT),
        w1=pad_w(w1, in_dim, H1), b1=pad_b(b1, H1),
        w2=pad_w(w2, H1, H2),     b2=pad_b(b2, H2),
        w3=pad_w(w3, H2, H3),     b3=pad_b(b3, H3),
        w4=pad_w(w4, H3, OUT),    b4=pad_b(b4, OUT),
    )


def _choose_k_split(in_dim, h1p, vmem_cap):
    """How to tile fc1's K (input) dim.

    Keep w1 fully resident (fetched once, single buffer) whenever its bf16
    copy fits in half of VMEM; otherwise split K into 128-aligned chunks whose
    double-buffered block fits in a quarter of VMEM (needed at large ndf,
    especially on v7x's 64 MiB VMEM).
    """
    if in_dim * h1p * 2 <= vmem_cap // 2:
        return 1, in_dim
    blk_budget = vmem_cap // 4
    for nk in range(2, 4096):
        if in_dim % nk:
            continue
        tk = in_dim // nk
        if tk % 128 == 0 and 2 * tk * h1p * 2 <= blk_budget:
            return nk, tk
    # TODO(synk): in_dim with no 128-aligned divisor small enough; fall back to
    # a fully-resident fc1 (may exceed VMEM for exotic shapes / huge ndf).
    return 1, in_dim


def netD_0_forward(x, prep, *, tm=1024):
    """x: (B, ndf*192) float32.  prep: output of prepare_params()."""
    B, in_dim = x.shape
    assert in_dim == prep["in_dim"], (in_dim, prep["in_dim"])
    H1, H2, H3, OUT = prep["dims"]

    # --- generation-aware VMEM capacity --------------------------------------
    try:
        vmem_cap = int(pltpu.get_tpu_info().vmem_capacity_bytes)
    except Exception:
        vmem_cap = 64 << 20                       # conservative (v7x per-TC)

    # --- fc1 K-split ----------------------------------------------------------
    nk, TK = _choose_k_split(in_dim, H1, vmem_cap)

    # --- batch tiling ---------------------------------------------------------
    # Large tile (amortize ~0.35 us/step + bigger DMAs), multiple of 16 for
    # bf16 sublane packing; split into >= 2 tiles when B allows so the
    # "parallel" batch axis can use both v7x TensorCores.
    TM = min(tm, _round_up(B, 16))
    if B >= 32 and _round_up(B, TM) == TM:
        TM = _round_up((B + 1) // 2, 16)
    Bp = _round_up(B, TM)
    xp = x if Bp == B else jnp.pad(x, ((0, Bp - B), (0, 0)))   # <= TM-1 zero rows

    grid = (Bp // TM, nk)

    # --- VMEM budget (weights single-buffered, x triple-, out double-) -------
    w1_bytes = TK * H1 * 2 * (1 if nk == 1 else 2)
    rest_w_bytes = (H1 * H2 + H2 * H3 + H3 * OUT) * 2
    bias_bytes = (H1 + H2 + H3 + OUT) * 4
    x_bytes = 3 * TM * TK * 4
    out_bytes = 2 * TM * OUT * 4
    acc_bytes = TM * H1 * 4
    slack = 2 * TM * max(H1, H2) * 4 + (4 << 20)
    needed = (w1_bytes + rest_w_bytes + bias_bytes + x_bytes + out_bytes
              + acc_bytes + slack)
    vmem_limit = int(max(32 << 20, min(needed, vmem_cap - (8 << 20))))

    args = (xp, prep["w1"], prep["b1"], prep["w2"], prep["b2"],
            prep["w3"], prep["b3"], prep["w4"], prep["b4"])

    def run(use_buffer_hints):
        def spec(shape, index_map, buffers):
            if use_buffer_hints and buffers is not None:
                return pl.BlockSpec(shape, index_map,
                                    pipeline_mode=pl.Buffered(buffers))
            return pl.BlockSpec(shape, index_map)

        resident = lambda shape: spec(shape, lambda i, k: (0, 0), 1)
        x_spec = spec((TM, TK), lambda i, k: (i, k), 3)
        if nk == 1:
            w1_spec = resident((in_dim, H1))
        else:
            w1_spec = spec((TK, H1), lambda i, k: (k, 0), None)  # default 2 buffers

        return pl.pallas_call(
            _mlp_kernel,
            out_shape=jax.ShapeDtypeStruct((Bp, OUT), jnp.float32),
            grid=grid,
            in_specs=[
                x_spec, w1_spec,
                resident(prep["b1"].shape),
                resident(prep["w2"].shape), resident(prep["b2"].shape),
                resident(prep["w3"].shape), resident(prep["b3"].shape),
                resident(prep["w4"].shape), resident(prep["b4"].shape),
            ],
            out_specs=pl.BlockSpec((TM, OUT), lambda i, k: (i, 0)),
            scratch_shapes=[pltpu.VMEM((TM, H1), jnp.float32)],
            compiler_params=pltpu.CompilerParams(
                dimension_semantics=("parallel", "arbitrary"),
                vmem_limit_bytes=vmem_limit,
            ),
        )(*args)

    try:
        out = run(True)
    except Exception:
        # pipeline_mode / Buffered hints unsupported on this jax build:
        # fall back to default double-buffering (correctness unaffected).
        out = run(False)

    return out[:B, :1]


def init_params(key, ndf):
    """Deterministic init matching nn.Linear default (uniform +/- 1/sqrt(fan_in))."""
    dims = [ndf * 64 * 3, ndf * 16 * 4, ndf * 16, ndf * 4, 1]
    params = {}
    for name, d_in, d_out in zip(["fc1", "fc2", "fc3", "fc4"], dims[:-1], dims[1:]):
        key, kw, kb = jax.random.split(key, 3)
        bound = 1.0 / jnp.sqrt(jnp.float32(d_in))
        # Weight stored as (in, out) so the kernel does x @ w  (== PyTorch x @ W.T).
        w = jax.random.uniform(kw, (d_in, d_out), jnp.float32, -bound, bound)
        b = jax.random.uniform(kb, (1, d_out), jnp.float32, -bound, bound)
        params[name] = (w, b)
    return params


def reference_forward(x, params):
    # Matches the kernel's numerics: bf16 matmul operands, f32 accumulation.
    h = x
    for i, name in enumerate(["fc1", "fc2", "fc3", "fc4"]):
        w, b = params[name]
        h = jnp.dot(h.astype(jnp.bfloat16), w.astype(jnp.bfloat16),
                    preferred_element_type=jnp.float32) + b
        if i < 3:
            h = jnp.where(h > 0, h, 0.2 * h)
    return jax.nn.sigmoid(h).reshape(-1, 1)


if __name__ == "__main__":
    ndf = 4          # in_dim = 768, hidden dims 256, 64, 16
    B = 8
    key = jax.random.PRNGKey(0)
    key, kx = jax.random.split(key)
    x = jax.random.normal(kx, (B, ndf * 64 * 3), jnp.float32)

    params = init_params(key, ndf)
    prep = prepare_params(params)        # one-time weight prep, reused across calls

    y = netD_0_forward(x, prep)
    y = jax.block_until_ready(y)

    y_ref = reference_forward(x, params)
    assert y.shape == (B, 1), y.shape
    assert jnp.allclose(y, y_ref, atol=2e-3), float(jnp.max(jnp.abs(y - y_ref)))

    print("KERNEL_OK")
</pallas_src>

<mosaic_0001>
module attributes {stable_mosaic.version = 11 : i64} {
  func.func @_mlp_kernel(%arg0: i32, %arg1: i32, %arg2: memref<16x768xf32, #tpu.memory_space<vmem>>, %arg3: memref<768x256xbf16, #tpu.memory_space<vmem>>, %arg4: memref<1x256xf32, #tpu.memory_space<vmem>>, %arg5: memref<256x128xbf16, #tpu.memory_space<vmem>>, %arg6: memref<1x128xf32, #tpu.memory_space<vmem>>, %arg7: memref<128x128xbf16, #tpu.memory_space<vmem>>, %arg8: memref<1x128xf32, #tpu.memory_space<vmem>>, %arg9: memref<128x128xbf16, #tpu.memory_space<vmem>>, %arg10: memref<1x128xf32, #tpu.memory_space<vmem>>, %arg11: memref<16x128xf32, #tpu.memory_space<vmem>>, %arg12: memref<16x256xf32, #tpu.memory_space<vmem>>) attributes {dimension_semantics = [#tpu.dimension_semantics<parallel>, #tpu.dimension_semantics<arbitrary>], iteration_bounds = array<i64: 1, 1>, scalar_prefetch = 0 : i64, scratch_operands = 1 : i64, tpu.core_type = #tpu.core_type<tc>, window_params = [{transform_indices = @transform_0, window_bounds = array<i64: 16, 768>}, {pipeline_mode = #tpu.pipeline_mode<synchronous>, transform_indices = @transform_1, window_bounds = array<i64: 768, 256>}, {pipeline_mode = #tpu.pipeline_mode<synchronous>, transform_indices = @transform_2, window_bounds = array<i64: 1, 256>}, {pipeline_mode = #tpu.pipeline_mode<synchronous>, transform_indices = @transform_3, window_bounds = array<i64: 256, 128>}, {pipeline_mode = #tpu.pipeline_mode<synchronous>, transform_indices = @transform_4, window_bounds = array<i64: 1, 128>}, {pipeline_mode = #tpu.pipeline_mode<synchronous>, transform_indices = @transform_5, window_bounds = array<i64: 128, 128>}, {pipeline_mode = #tpu.pipeline_mode<synchronous>, transform_indices = @transform_6, window_bounds = array<i64: 1, 128>}, {pipeline_mode = #tpu.pipeline_mode<synchronous>, transform_indices = @transform_7, window_bounds = array<i64: 128, 128>}, {pipeline_mode = #tpu.pipeline_mode<synchronous>, transform_indices = @transform_8, window_bounds = array<i64: 1, 128>}, {transform_indices = @transform_9, window_bounds = array<i64: 16, 128>}]} {
    %c0_i32 = arith.constant 0 : i32
    %0 = arith.cmpi eq, %arg1, %c0_i32 : i32
    %1 = arith.extui %0 : i1 to i32
    %c0_i32_0 = arith.constant 0 : i32
    %2 = arith.cmpi ne, %1, %c0_i32_0 : i32
    scf.if %2 {
      %cst_10 = arith.constant 0.000000e+00 : f32
      %13 = vector.broadcast %cst_10 : f32 to vector<16x256xf32>
      %c0_11 = arith.constant 0 : index
      %c0_12 = arith.constant 0 : index
      %14 = vector.load %arg12[%c0_11, %c0_12] : memref<16x256xf32, #tpu.memory_space<vmem>>, vector<16x256xf32>
      tpu.vector_store %arg12[%c0_11, %c0_12], %13 {strides = array<i32>} : memref<16x256xf32, #tpu.memory_space<vmem>>, vector<16x256xf32>,
    } else {
    }
    %c0 = arith.constant 0 : index
    %c0_1 = arith.constant 0 : index
    %3 = vector.load %arg2[%c0, %c0_1] : memref<16x768xf32, #tpu.memory_space<vmem>>, vector<16x768xf32>
    %4 = arith.truncf %3 : vector<16x768xf32> to vector<16x768xbf16>
    %c0_2 = arith.constant 0 : index
    %c0_3 = arith.constant 0 : index
    %5 = vector.load %arg12[%c0_2, %c0_3] : memref<16x256xf32, #tpu.memory_space<vmem>>, vector<16x256xf32>
    %c0_4 = arith.constant 0 : index
    %c0_5 = arith.constant 0 : index
    %6 = vector.load %arg3[%c0_4, %c0_5] : memref<768x256xbf16, #tpu.memory_space<vmem>>, vector<768x256xbf16>
    %cst = arith.constant dense<0.000000e+00> : vector<16x256xf32>
    %7 = tpu.matmul %4, %6, %cst {dimension_numbers = #tpu.dot_dimension_numbers<[1], [0], [0], [1], [0, 0, 1, 1], [], []>} : vector<16x768xbf16>, vector<768x256xbf16>, vector<16x256xf32> -> vector<16x256xf32>
    %8 = arith.addf %5, %7 : vector<16x256xf32>
    %c0_6 = arith.constant 0 : index
    %c0_7 = arith.constant 0 : index
    %9 = vector.load %arg12[%c0_6, %c0_7] : memref<16x256xf32, #tpu.memory_space<vmem>>, vector<16x256xf32>
    tpu.vector_store %arg12[%c0_6, %c0_7], %8 {strides = array<i32>} : memref<16x256xf32, #tpu.memory_space<vmem>>, vector<16x256xf32>,
    %c0_i32_8 = arith.constant 0 : i32
    %10 = arith.cmpi eq, %arg1, %c0_i32_8 : i32
    %11 = arith.extui %10 : i1 to i32
    %c0_i32_9 = arith.constant 0 : i32
    %12 = arith.cmpi ne, %11, %c0_i32_9 : i32
    scf.if %12 {
      %c0_10 = arith.constant 0 : index
      %c0_11 = arith.constant 0 : index
      %13 = vector.load %arg12[%c0_10, %c0_11] : memref<16x256xf32, #tpu.memory_space<vmem>>, vector<16x256xf32>
      %c0_12 = arith.constant 0 : index
      %c0_13 = arith.constant 0 : index
      %14 = vector.load %arg4[%c0_12, %c0_13] : memref<1x256xf32, #tpu.memory_space<vmem>>, vector<1x256xf32>
      %15 = vector.broadcast %14 : vector<1x256xf32> to vector<16x256xf32>
      %16 = arith.addf %13, %15 : vector<16x256xf32>
      %cst_14 = arith.constant 0.000000e+00 : f32
      %17 = vector.broadcast %cst_14 : f32 to vector<16x256xf32>
      %18 = arith.cmpf ogt, %16, %17 : vector<16x256xf32>
      %cst_15 = arith.constant 2.000000e-01 : f32
      %19 = vector.broadcast %cst_15 : f32 to vector<16x256xf32>
      %20 = arith.mulf %19, %16 : vector<16x256xf32>
      %21 = arith.select %18, %16, %20 : vector<16x256xi1>, vector<16x256xf32>
      %22 = arith.truncf %21 : vector<16x256xf32> to vector<16x256xbf16>
      %c0_16 = arith.constant 0 : index
      %c0_17 = arith.constant 0 : index
      %23 = vector.load %arg5[%c0_16, %c0_17] : memref<256x128xbf16, #tpu.memory_space<vmem>>, vector<256x128xbf16>
      %cst_18 = arith.constant dense<0.000000e+00> : vector<16x128xf32>
      %24 = tpu.matmul %22, %23, %cst_18 {dimension_numbers = #tpu.dot_dimension_numbers<[1], [0], [0], [1], [0, 0, 1, 1], [], []>} : vector<16x256xbf16>, vector<256x128xbf16>, vector<16x128xf32> -> vector<16x128xf32>
      %c0_19 = arith.constant 0 : index
      %c0_20 = arith.constant 0 : index
      %25 = vector.load %arg6[%c0_19, %c0_20] : memref<1x128xf32, #tpu.memory_space<vmem>>, vector<1x128xf32>
      %26 = vector.broadcast %25 : vector<1x128xf32> to vector<16x128xf32>
      %27 = arith.addf %24, %26 : vector<16x128xf32>
      %cst_21 = arith.constant 0.000000e+00 : f32
      %28 = vector.broadcast %cst_21 : f32 to vector<16x128xf32>
      %29 = arith.cmpf ogt, %27, %28 : vector<16x128xf32>
      %cst_22 = arith.constant 2.000000e-01 : f32
      %30 = vector.broadcast %cst_22 : f32 to vector<16x128xf32>
      %31 = arith.mulf %30, %27 : vector<16x128xf32>
      %32 = arith.select %29, %27, %31 : vector<16x128xi1>, vector<16x128xf32>
      %33 = arith.truncf %32 : vector<16x128xf32> to vector<16x128xbf16>
      %c0_23 = arith.constant 0 : index
      %c0_24 = arith.constant 0 : index
      %34 = vector.load %arg7[%c0_23, %c0_24] : memref<128x128xbf16, #tpu.memory_space<vmem>>, vector<128x128xbf16>
      %cst_25 = arith.constant dense<0.000000e+00> : vector<16x128xf32>
      %35 = tpu.matmul %33, %34, %cst_25 {dimension_numbers = #tpu.dot_dimension_numbers<[1], [0], [0], [1], [0, 0, 1, 1], [], []>} : vector<16x128xbf16>, vector<128x128xbf16>, vector<16x128xf32> -> vector<16x128xf32>
      %c0_26 = arith.constant 0 : index
      %c0_27 = arith.constant 0 : index
      %36 = vector.load %arg8[%c0_26, %c0_27] : memref<1x128xf32, #tpu.memory_space<vmem>>, vector<1x128xf32>
      %37 = vector.broadcast %36 : vector<1x128xf32> to vector<16x128xf32>
      %38 = arith.addf %35, %37 : vector<16x128xf32>
      %cst_28 = arith.constant 0.000000e+00 : f32
      %39 = vector.broadcast %cst_28 : f32 to vector<16x128xf32>
      %40 = arith.cmpf ogt, %38, %39 : vector<16x128xf32>
      %cst_29 = arith.constant 2.000000e-01 : f32
      %41 = vector.broadcast %cst_29 : f32 to vector<16x128xf32>
      %42 = arith.mulf %41, %38 : vector<16x128xf32>
      %43 = arith.select %40, %38, %42 : vector<16x128xi1>, vector<16x128xf32>
      %44 = arith.truncf %43 : vector<16x128xf32> to vector<16x128xbf16>
      %c0_30 = arith.constant 0 : index
      %c0_31 = arith.constant 0 : index
      %45 = vector.load %arg9[%c0_30, %c0_31] : memref<128x128xbf16, #tpu.memory_space<vmem>>, vector<128x128xbf16>
      %cst_32 = arith.constant dense<0.000000e+00> : vector<16x128xf32>
      %46 = tpu.matmul %44, %45, %cst_32 {dimension_numbers = #tpu.dot_dimension_numbers<[1], [0], [0], [1], [0, 0, 1, 1], [], []>} : vector<16x128xbf16>, vector<128x128xbf16>, vector<16x128xf32> -> vector<16x128xf32>
      %c0_33 = arith.constant 0 : index
      %c0_34 = arith.constant 0 : index
      %47 = vector.load %arg10[%c0_33, %c0_34] : memref<1x128xf32, #tpu.memory_space<vmem>>, vector<1x128xf32>
      %48 = vector.broadcast %47 : vector<1x128xf32> to vector<16x128xf32>
      %49 = arith.addf %46, %48 : vector<16x128xf32>
      %cst_35 = arith.constant 0.000000e+00 : f32
      %50 = vector.broadcast %cst_35 : f32 to vector<16x128xf32>
      %51 = arith.subf %50, %49 : vector<16x128xf32>
      %52 = math.exp %51 : vector<16x128xf32>
      %cst_36 = arith.constant 1.000000e+00 : f32
      %53 = vector.broadcast %cst_36 : f32 to vector<16x128xf32>
      %54 = arith.addf %53, %52 : vector<16x128xf32>
      %55 = tpu.reciprocal %54 : vector<16x128xf32> -> vector<16x128xf32>
      %c0_37 = arith.constant 0 : index
      %c0_38 = arith.constant 0 : index
      %56 = vector.load %arg11[%c0_37, %c0_38] : memref<16x128xf32, #tpu.memory_space<vmem>>, vector<16x128xf32>
      tpu.vector_store %arg11[%c0_37, %c0_38], %55 {strides = array<i32>} : memref<16x128xf32, #tpu.memory_space<vmem>>, vector<16x128xf32>,
    } else {
    }
    return
  }
  func.func @transform_0(%arg0: i32, %arg1: i32) -> (i32, i32) {
    %c0_i32 = arith.constant 0 : i32
    return %arg0, %arg1 : i32, i32
  }
  func.func @transform_1(%arg0: i32, %arg1: i32) -> (i32, i32) {
    %c0_i32 = arith.constant 0 : i32
    %c0_i32_0 = arith.constant 0 : i32
    %c0_i32_1 = arith.constant 0 : i32
    return %c0_i32, %c0_i32_0 : i32, i32
  }
  func.func @transform_2(%arg0: i32, %arg1: i32) -> (i32, i32) {
    %c0_i32 = arith.constant 0 : i32
    %c0_i32_0 = arith.constant 0 : i32
    %c0_i32_1 = arith.constant 0 : i32
    return %c0_i32, %c0_i32_0 : i32, i32
  }
  func.func @transform_3(%arg0: i32, %arg1: i32) -> (i32, i32) {
    %c0_i32 = arith.constant 0 : i32
    %c0_i32_0 = arith.constant 0 : i32
    %c0_i32_1 = arith.constant 0 : i32
    return %c0_i32, %c0_i32_0 : i32, i32
  }
  func.func @transform_4(%arg0: i32, %arg1: i32) -> (i32, i32) {
    %c0_i32 = arith.constant 0 : i32
    %c0_i32_0 = arith.constant 0 : i32
    %c0_i32_1 = arith.constant 0 : i32
    return %c0_i32, %c0_i32_0 : i32, i32
  }
  func.func @transform_5(%arg0: i32, %arg1: i32) -> (i32, i32) {
    %c0_i32 = arith.constant 0 : i32
    %c0_i32_0 = arith.constant 0 : i32
    %c0_i32_1 = arith.constant 0 : i32
    return %c0_i32, %c0_i32_0 : i32, i32
  }
  func.func @transform_6(%arg0: i32, %arg1: i32) -> (i32, i32) {
    %c0_i32 = arith.constant 0 : i32
    %c0_i32_0 = arith.constant 0 : i32
    %c0_i32_1 = arith.constant 0 : i32
    return %c0_i32, %c0_i32_0 : i32, i32
  }
  func.func @transform_7(%arg0: i32, %arg1: i32) -> (i32, i32) {
    %c0_i32 = arith.constant 0 : i32
    %c0_i32_0 = arith.constant 0 : i32
    %c0_i32_1 = arith.constant 0 : i32
    return %c0_i32, %c0_i32_0 : i32, i32
  }
  func.func @transform_8(%arg0: i32, %arg1: i32) -> (i32, i32) {
    %c0_i32 = arith.constant 0 : i32
    %c0_i32_0 = arith.constant 0 : i32
    %c0_i32_1 = arith.constant 0 : i32
    return %c0_i32, %c0_i32_0 : i32, i32
  }
  func.func @transform_9(%arg0: i32, %arg1: i32) -> (i32, i32) {
    %c0_i32 = arith.constant 0 : i32
    %c0_i32_0 = arith.constant 0 : i32
    return %arg0, %c0_i32 : i32, i32
  }
}

</mosaic_0001>

<llo_original>
// kernel: tpu_custom_call.1
$region0: #{tpu_custom_call.1}
  #allocation0 [shape = 'u32[]', space=smem, size = 0x4, offset = 0x4, fixed_abs, tag = 'smem constant byte address 0x4 - core index']
  #allocation1 [shape = 'u32[72,128]{1,0:T(1,128)}', space=vmem, size = 0x9000, scoped, tag = 'internal scratch']
  #allocation2 [shape = 'f32[16,256]{1,0:T(8,128)}', space=vmem, size = 0x4000, scoped, tag = 'scratch operand']
  %s0 = inlined_call_operand.hbm [shape: f32[16,768], index: 0, kind: input, shape index: {}]
  %s1 = inlined_call_operand.hbm [shape: bf16[768,256], index: 1, kind: input, shape index: {}]
  %s2 = inlined_call_operand.hbm [shape: f32[1,256], index: 2, kind: input, shape index: {}]
  %s3 = inlined_call_operand.hbm [shape: bf16[256,128], index: 3, kind: input, shape index: {}]
  %s4 = inlined_call_operand.vmem [shape: f32[1,128], index: 4, kind: input, shape index: {}]
  %s5 = inlined_call_operand.hbm [shape: bf16[128,128], index: 5, kind: input, shape index: {}]
  %s6 = inlined_call_operand.vmem [shape: f32[1,128], index: 6, kind: input, shape index: {}]
  %s7 = inlined_call_operand.hbm [shape: bf16[128,128], index: 7, kind: input, shape index: {}]
  %s8 = inlined_call_operand.vmem [shape: f32[1,128], index: 8, kind: input, shape index: {}]
  %s9 = inlined_call_operand.hbm [shape: f32[16,128], index: 9, kind: output, shape index: {}]
  %s10 = sld [smem:[#allocation0]]
  $region78: #{tpu_custom_call.1} parent=0
    _
  %s12 = ssub.s32 1, %s10
  %s13 = scalar_select 0, %s12, %s10
  $region1: #{tpu_custom_call.1} parent=0
    #allocation3 [shape = 'u8[49152]{0}', space=vmem, size = 0xc000, scoped, tag = 'input window, operand 0, single buffered']
    #allocation4 [shape = 's32[1]{0}', space=sflag, size = 0x4, scoped, tag = 'scoped memory for tpu_custom_call.1']
    #allocation5 [shape = 's32[1]{0}', space=sflag, size = 0x4, scoped, tag = 'scoped memory for tpu_custom_call.1']
    #allocation6 [shape = 'u8[393216]{0}', space=vmem, size = 0x60000, scoped, tag = 'input window, operand 1, single buffered']
    #allocation7 [shape = 's32[1]{0}', space=sflag, size = 0x4, scoped, tag = 'scoped memory for tpu_custom_call.1']
    #allocation8 [shape = 'u8[1024]{0}', space=vmem, size = 0x400, scoped, tag = 'input window, operand 2, single buffered']
    #allocation9 [shape = 'u8[65536]{0}', space=vmem, size = 0x10000, scoped, tag = 'input window, operand 3, single buffered']
    #allocation10 [shape = 's32[1]{0}', space=sflag, size = 0x4, scoped, tag = 'scoped memory for tpu_custom_call.1']
    #allocation11 [shape = 'u8[32768]{0}', space=vmem, size = 0x8000, scoped, tag = 'input window, operand 5, single buffered']
    #allocation12 [shape = 'u8[32768]{0}', space=vmem, size = 0x8000, scoped, tag = 'input window, operand 7, single buffered']
    #allocation13 [shape = 's32[1]{0}', space=sflag, size = 0x4, scoped, tag = 'scoped memory for tpu_custom_call.1']
    #allocation14 [shape = 'u8[8192]{0}', space=vmem, size = 0x2000, scoped, tag = 'output window, operand 0, single buffered']
    %14 = vsyncpa [#allocation4], 0
    %15 = vsyncpa [#allocation7], 0
    %16 = vsyncpa [#allocation10], 0
    %17 = vsyncpa [#allocation13], 0
    %18 = vsyncpa [#allocation5], 0
    // Predicated region
    $region2: #{tpu_custom_call.1} parent=1 // pred_check
      _
    $region3: #{tpu_custom_call.1} parent=1 // pred_check_branch
      %20 = sbr.rel (0) target = $region5
    $region4: #{tpu_custom_call.1} parent=1 // pred_region
      %22 = vsyncadd [#allocation4], 0
      %s23 = sshll.u32 %s0, 4
      %s24 = int_to_ptr.hbm [resolvable:$true] %s23
      %s25 = sshll.u32 [#allocation3], 4
      %s26 = int_to_ptr.vmem [resolvable:$true] %s25
      %31 = dma.hbm_to_vmem [thread:$0]  %s24, 1536, %s26, [#allocation4], 768, 768, 48
    $region5: #{tpu_custom_call.1} parent=1 // pred_fallthru
      _
    // Predicated region
    $region6: #{tpu_custom_call.1} parent=1 // pred_check
      _
    $region7: #{tpu_custom_call.1} parent=1 // pred_check_branch
      %33 = sbr.rel (0) target = $region9
    $region8: #{tpu_custom_call.1} parent=1 // pred_region
      %35 = vsyncadd [#allocation7], 0
      %s36 = sshll.u32 %s1, 4
      %s37 = int_to_ptr.hbm [resolvable:$true] %s36
      %s38 = sshll.u32 [#allocation6], 4
      %s39 = int_to_ptr.vmem [resolvable:$true] %s38
      %44 = dma.hbm_to_vmem [thread:$0]  %s37, 12288, %s39, [#allocation7], 128, 128, 8
    $region9: #{tpu_custom_call.1} parent=1 // pred_fallthru
      _
    // Predicated region
    $region10: #{tpu_custom_call.1} parent=1 // pred_check
      _
    $region11: #{tpu_custom_call.1} parent=1 // pred_check_branch
      %46 = sbr.rel (0) target = $region13
    $region12: #{tpu_custom_call.1} parent=1 // pred_region
      %48 = vsyncadd [#allocation7], 0
      %s50 = sshll.u32 %s2, 4
      %s51 = int_to_ptr.hbm [resolvable:$true] %s50
      %s52 = sshll.u32 [#allocation8], 4
      %s53 = int_to_ptr.vmem [resolvable:$true] %s52
      %55 = dma.hbm_to_vmem [thread:$0]  %s51, 32, %s53, [#allocation7]
    $region13: #{tpu_custom_call.1} parent=1 // pred_fallthru
      _
    // Predicated region
    $region14: #{tpu_custom_call.1} parent=1 // pred_check
      _
    $region15: #{tpu_custom_call.1} parent=1 // pred_check_branch
      %57 = sbr.rel (0) target = $region17
    $region16: #{tpu_custom_call.1} parent=1 // pred_region
      %59 = vsyncadd [#allocation10], 0
      %s60 = sshll.u32 %s3, 4
      %s61 = int_to_ptr.hbm [resolvable:$true] %s60
      %s62 = sshll.u32 [#allocation9], 4
      %s63 = int_to_ptr.vmem [resolvable:$true] %s62
      %68 = dma.hbm_to_vmem [thread:$0]  %s61, 2048, %s63, [#allocation10], 64, 64, 4
    $region17: #{tpu_custom_call.1} parent=1 // pred_fallthru
      _
    // Predicated region
    $region18: #{tpu_custom_call.1} parent=1 // pred_check
      _
    $region19: #{tpu_custom_call.1} parent=1 // pred_check_branch
      %70 = sbr.rel (0) target = $region21
    $region20: #{tpu_custom_call.1} parent=1 // pred_region
      _
    $region21: #{tpu_custom_call.1} parent=1 // pred_fallthru
      _
    // Predicated region
    $region22: #{tpu_custom_call.1} parent=1 // pred_check
      _
    $region23: #{tpu_custom_call.1} parent=1 // pred_check_branch
      %72 = sbr.rel (0) target = $region25
    $region24: #{tpu_custom_call.1} parent=1 // pred_region
      %74 = vsyncadd [#allocation10], 0
      %s75 = sshll.u32 %s5, 4
      %s76 = int_to_ptr.hbm [resolvable:$true] %s75
      %s77 = sshll.u32 [#allocation11], 4
      %s78 = int_to_ptr.vmem [resolvable:$true] %s77
      %83 = dma.hbm_to_vmem [thread:$0]  %s76, 1024, %s78, [#allocation10], 64, 64, 4
    $region25: #{tpu_custom_call.1} parent=1 // pred_fallthru
      _
    // Predicated region
    $region26: #{tpu_custom_call.1} parent=1 // pred_check
      _
    $region27: #{tpu_custom_call.1} parent=1 // pred_check_branch
      %85 = sbr.rel (0) target = $region29
    $region28: #{tpu_custom_call.1} parent=1 // pred_region
      _
    $region29: #{tpu_custom_call.1} parent=1 // pred_fallthru
      _
    // Predicated region
    $region30: #{tpu_custom_call.1} parent=1 // pred_check
      _
    $region31: #{tpu_custom_call.1} parent=1 // pred_check_branch
      %87 = sbr.rel (0) target = $region33
    $region32: #{tpu_custom_call.1} parent=1 // pred_region
      %89 = vsyncadd [#allocation13], 0
      %s90 = sshll.u32 %s7, 4
      %s91 = int_to_ptr.hbm [resolvable:$true] %s90
      %s92 = sshll.u32 [#allocation12], 4
      %s93 = int_to_ptr.vmem [resolvable:$true] %s92
      %98 = dma.hbm_to_vmem [thread:$0]  %s91, 1024, %s93, [#allocation13], 64, 64, 4
    $region33: #{tpu_custom_call.1} parent=1 // pred_fallthru
      _
    // Predicated region
    $region34: #{tpu_custom_call.1} parent=1 // pred_check
      _
    $region35: #{tpu_custom_call.1} parent=1 // pred_check_branch
      %100 = sbr.rel (0) target = $region37
    $region36: #{tpu_custom_call.1} parent=1 // pred_region
      _
    $region37: #{tpu_custom_call.1} parent=1 // pred_fallthru
      _
    // Predicated region
    $region38: #{tpu_custom_call.1} parent=1 // pred_check
      _
    $region39: #{tpu_custom_call.1} parent=1 // pred_check_branch
      %102 = sbr.rel (0) target = $region41
    $region40: #{tpu_custom_call.1} parent=1 // pred_region
      %104 = dma.done [#allocation4], 1536
    $region41: #{tpu_custom_call.1} parent=1 // pred_fallthru
      _
    // Predicated region
    $region42: #{tpu_custom_call.1} parent=1 // pred_check
      _
    $region43: #{tpu_custom_call.1} parent=1 // pred_check_branch
      %106 = sbr.rel (0) target = $region45
    $region44: #{tpu_custom_call.1} parent=1 // pred_region
      %108 = dma.done [#allocation7], 12288
    $region45: #{tpu_custom_call.1} parent=1 // pred_fallthru
      _
    // Predicated region
    $region46: #{tpu_custom_call.1} parent=1 // pred_check
      _
    $region47: #{tpu_custom_call.1} parent=1 // pred_check_branch
      %110 = sbr.rel (0) target = $region49
    $region48: #{tpu_custom_call.1} parent=1 // pred_region
      %112 = dma.done [#allocation7], 32
    $region49: #{tpu_custom_call.1} parent=1 // pred_fallthru
      _
    // Predicated region
    $region50: #{tpu_custom_call.1} parent=1 // pred_check
      _
    $region51: #{tpu_custom_call.1} parent=1 // pred_check_branch
      %114 = sbr.rel (0) target = $region53
    $region52: #{tpu_custom_call.1} parent=1 // pred_region
      %116 = dma.done [#allocation10], 2048
    $region53: #{tpu_custom_call.1} parent=1 // pred_fallthru
      _
    // Predicated region
    $region54: #{tpu_custom_call.1} parent=1 // pred_check
      _
    $region55: #{tpu_custom_call.1} parent=1 // pred_check_branch
      %118 = sbr.rel (0) target = $region57
    $region56: #{tpu_custom_call.1} parent=1 // pred_region
      %120 = dma.done [#allocation10], 1024
    $region57: #{tpu_custom_call.1} parent=1 // pred_fallthru
      _
    // Predicated region
    $region58: #{tpu_custom_call.1} parent=1 // pred_check
      _
    $region59: #{tpu_custom_call.1} parent=1 // pred_check_branch
      %122 = sbr.rel (0) target = $region61
    $region60: #{tpu_custom_call.1} parent=1 // pred_region
      %124 = dma.done [#allocation13], 1024
    $region61: #{tpu_custom_call.1} parent=1 // pred_fallthru
      _
    %p125 = scmp.eq.s32.totalorder 0, 0
    // Predicated region
    $region62: #{tpu_custom_call.1} parent=1 // pred_check
      %p126 = pneg %p125
    $region63: #{tpu_custom_call.1} parent=1 // pred_check_branch
      %128 = sbr.rel (%p126) target = $region65
    $region64: #{tpu_custom_call.1} parent=1 // pred_region
      %129 = vst [vmem:[#allocation2] sm:$0xff] 0.0
      %130 = vst [vmem:[#allocation2 + $0x8] sm:$0xff] 0.0
      %131 = vst [vmem:[#allocation2 + $0x10] sm:$0xff] 0.0
      %132 = vst [vmem:[#allocation2 + $0x18] sm:$0xff] 0.0
    $region65: #{tpu_custom_call.1} parent=1 // pred_fallthru
      _
    %v133 = vld [vmem:[#allocation3] sm:$0xff]
    %v134 = vld [vmem:[#allocation3 + $0x8] sm:$0xff]
    %v135 = vld [vmem:[#allocation3 + $0x10] sm:$0xff]
    %v136 = vld [vmem:[#allocation3 + $0x18] sm:$0xff]
    %v137 = vld [vmem:[#allocation3 + $0x20] sm:$0xff]
    %v138 = vld [vmem:[#allocation3 + $0x28] sm:$0xff]
    %v139 = vld [vmem:[#allocation3 + $0x30] sm:$0xff]
    %v140 = vld [vmem:[#allocation3 + $0x38] sm:$0xff]
    %v141 = vld [vmem:[#allocation3 + $0x40] sm:$0xff]
    %v142 = vld [vmem:[#allocation3 + $0x48] sm:$0xff]
    %v143 = vld [vmem:[#allocation3 + $0x50] sm:$0xff]
    %v144 = vld [vmem:[#allocation3 + $0x58] sm:$0xff]
    %v145 = vpack.c.bf16 %v139, %v133
    %v146 = vpack.c.bf16 %v140, %v134
    %v147 = vpack.c.bf16 %v141, %v135
    %v148 = vpack.c.bf16 %v142, %v136
    %v149 = vpack.c.bf16 %v143, %v137
    %v150 = vpack.c.bf16 %v144, %v138
    %v151 = vld [vmem:[#allocation2] sm:$0xff]
    %v152 = vld [vmem:[#allocation2 + $0x8] sm:$0xff]
    %v153 = vld [vmem:[#allocation2 + $0x10] sm:$0xff]
    %v154 = vld [vmem:[#allocation2 + $0x18] sm:$0xff]
    %v155 = vld [vmem:[#allocation6] sm:$0xff]
    %v156 = vld [vmem:[#allocation6 + $0x8] sm:$0xff]
    %v157 = vld [vmem:[#allocation6 + $0x10] sm:$0xff]
    %v158 = vld [vmem:[#allocation6 + $0x18] sm:$0xff]
    %v159 = vld [vmem:[#allocation6 + $0x20] sm:$0xff]
    %v160 = vld [vmem:[#allocation6 + $0x28] sm:$0xff]
    %v161 = vld [vmem:[#allocation6 + $0x30] sm:$0xff]
    %v162 = vld [vmem:[#allocation6 + $0x38] sm:$0xff]
    %v163 = vld [vmem:[#allocation6 + $0x40] sm:$0xff]
    %v164 = vld [vmem:[#allocation6 + $0x48] sm:$0xff]
    %v165 = vld [vmem:[#allocation6 + $0x50] sm:$0xff]
    %v166 = vld [vmem:[#allocation6 + $0x58] sm:$0xff]
    %v167 = vld [vmem:[#allocation6 + $0x60] sm:$0xff]
    %v168 = vld [vmem:[#allocation6 + $0x68] sm:$0xff]
    %v169 = vld [vmem:[#allocation6 + $0x70] sm:$0xff]
    %v170 = vld [vmem:[#allocation6 + $0x78] sm:$0xff]
    %v171 = vld [vmem:[#allocation6 + $0x80] sm:$0xff]
    %v172 = vld [vmem:[#allocation6 + $0x88] sm:$0xff]
    %v173 = vld [vmem:[#allocation6 + $0x90] sm:$0xff]
    %v174 = vld [vmem:[#allocation6 + $0x98] sm:$0xff]
    %v175 = vld [vmem:[#allocation6 + $0xa0] sm:$0xff]
    %v176 = vld [vmem:[#allocation6 + $0xa8] sm:$0xff]
    %v177 = vld [vmem:[#allocation6 + $0xb0] sm:$0xff]
    %v178 = vld [vmem:[#allocation6 + $0xb8] sm:$0xff]
    %v179 = vld [vmem:[#allocation6 + $0xc0] sm:$0xff]
    %v180 = vld [vmem:[#allocation6 + $0xc8] sm:$0xff]
    %v181 = vld [vmem:[#allocation6 + $0xd0] sm:$0xff]
    %v182 = vld [vmem:[#allocation6 + $0xd8] sm:$0xff]
    %v183 = vld [vmem:[#allocation6 + $0xe0] sm:$0xff]
    %v184 = vld [vmem:[#allocation6 + $0xe8] sm:$0xff]
    %v185 = vld [vmem:[#allocation6 + $0xf0] sm:$0xff]
    %v186 = vld [vmem:[#allocation6 + $0xf8] sm:$0xff]
    %v187 = vld [vmem:[#allocation6 + $0x100] sm:$0xff]
    %v188 = vld [vmem:[#allocation6 + $0x108] sm:$0xff]
    %v189 = vld [vmem:[#allocation6 + $0x110] sm:$0xff]
    %v190 = vld [vmem:[#allocation6 + $0x118] sm:$0xff]
    %v191 = vld [vmem:[#allocation6 + $0x120] sm:$0xff]
    %v192 = vld [vmem:[#allocation6 + $0x128] sm:$0xff]
    %v193 = vld [vmem:[#allocation6 + $0x130] sm:$0xff]
    %v194 = vld [vmem:[#allocation6 + $0x138] sm:$0xff]
    %v195 = vld [vmem:[#allocation6 + $0x140] sm:$0xff]
    %v196 = vld [vmem:[#allocation6 + $0x148] sm:$0xff]
    %v197 = vld [vmem:[#allocation6 + $0x150] sm:$0xff]
    %v198 = vld [vmem:[#allocation6 + $0x158] sm:$0xff]
    %v199 = vld [vmem:[#allocation6 + $0x160] sm:$0xff]
    %v200 = vld [vmem:[#allocation6 + $0x168] sm:$0xff]
    %v201 = vld [vmem:[#allocation6 + $0x170] sm:$0xff]
    %v202 = vld [vmem:[#allocation6 + $0x178] sm:$0xff]
    %v203 = vld [vmem:[#allocation6 + $0x180] sm:$0xff]
    %v204 = vld [vmem:[#allocation6 + $0x188] sm:$0xff]
    %v205 = vld [vmem:[#allocation6 + $0x190] sm:$0xff]
    %v206 = vld [vmem:[#allocation6 + $0x198] sm:$0xff]
    %v207 = vld [vmem:[#allocation6 + $0x1a0] sm:$0xff]
    %v208 = vld [vmem:[#allocation6 + $0x1a8] sm:$0xff]
    %v209 = vld [vmem:[#allocation6 + $0x1b0] sm:$0xff]
    %v210 = vld [vmem:[#allocation6 + $0x1b8] sm:$0xff]
    %v211 = vld [vmem:[#allocation6 + $0x1c0] sm:$0xff]
    %v212 = vld [vmem:[#allocation6 + $0x1c8] sm:$0xff]
    %v213 = vld [vmem:[#allocation6 + $0x1d0] sm:$0xff]
    %v214 = vld [vmem:[#allocation6 + $0x1d8] sm:$0xff]
    %v215 = vld [vmem:[#allocation6 + $0x1e0] sm:$0xff]
    %v216 = vld [vmem:[#allocation6 + $0x1e8] sm:$0xff]
    %v217 = vld [vmem:[#allocation6 + $0x1f0] sm:$0xff]
    %v218 = vld [vmem:[#allocation6 + $0x1f8] sm:$0xff]
    %v219 = vld [vmem:[#allocation6 + $0x200] sm:$0xff]
    %v220 = vld [vmem:[#allocation6 + $0x208] sm:$0xff]
    %v221 = vld [vmem:[#allocation6 + $0x210] sm:$0xff]
    %v222 = vld [vmem:[#allocation6 + $0x218] sm:$0xff]
    %v223 = vld [vmem:[#allocation6 + $0x220] sm:$0xff]
    %v224 = vld [vmem:[#allocation6 + $0x228] sm:$0xff]
    %v225 = vld [vmem:[#allocation6 + $0x230] sm:$0xff]
    %v226 = vld [vmem:[#allocation6 + $0x238] sm:$0xff]
    %v227 = vld [vmem:[#allocation6 + $0x240] sm:$0xff]
    %v228 = vld [vmem:[#allocation6 + $0x248] sm:$0xff]
    %v229 = vld [vmem:[#allocation6 + $0x250] sm:$0xff]
    %v230 = vld [vmem:[#allocation6 + $0x258] sm:$0xff]
    %v231 = vld [vmem:[#allocation6 + $0x260] sm:$0xff]
    %v232 = vld [vmem:[#allocation6 + $0x268] sm:$0xff]
    %v233 = vld [vmem:[#allocation6 + $0x270] sm:$0xff]
    %v234 = vld [vmem:[#allocation6 + $0x278] sm:$0xff]
    %v235 = vld [vmem:[#allocation6 + $0x280] sm:$0xff]
    %v236 = vld [vmem:[#allocation6 + $0x288] sm:$0xff]
    %v237 = vld [vmem:[#allocation6 + $0x290] sm:$0xff]
    %v238 = vld [vmem:[#allocation6 + $0x298] sm:$0xff]
    %v239 = vld [vmem:[#allocation6 + $0x2a0] sm:$0xff]
    %v240 = vld [vmem:[#allocation6 + $0x2a8] sm:$0xff]
    %v241 = vld [vmem:[#allocation6 + $0x2b0] sm:$0xff]
    %v242 = vld [vmem:[#allocation6 + $0x2b8] sm:$0xff]
    %v243 = vld [vmem:[#allocation6 + $0x2c0] sm:$0xff]
    %v244 = vld [vmem:[#allocation6 + $0x2c8] sm:$0xff]
    %v245 = vld [vmem:[#allocation6 + $0x2d0] sm:$0xff]
    %v246 = vld [vmem:[#allocation6 + $0x2d8] sm:$0xff]
    %v247 = vld [vmem:[#allocation6 + $0x2e0] sm:$0xff]
    %v248 = vld [vmem:[#allocation6 + $0x2e8] sm:$0xff]
    %v249 = vld [vmem:[#allocation6 + $0x2f0] sm:$0xff]
    %v250 = vld [vmem:[#allocation6 + $0x2f8] sm:$0xff]
    %v347 = vunpack.c.l.b16 %v155
    %v348 = vunpack.c.h.b16 %v155
    %v349 = vunpack.c.l.b16 %v156
    %v350 = vunpack.c.h.b16 %v156
    %v351 = vunpack.c.l.b16 %v157
    %v352 = vunpack.c.h.b16 %v157
    %v353 = vunpack.c.l.b16 %v158
    %v354 = vunpack.c.h.b16 %v158
    %v355 = vunpack.c.l.b16 %v159
    %v356 = vunpack.c.h.b16 %v159
    %v357 = vunpack.c.l.b16 %v160
    %v358 = vunpack.c.h.b16 %v160
    %v359 = vunpack.c.l.b16 %v161
    %v360 = vunpack.c.h.b16 %v161
    %v361 = vunpack.c.l.b16 %v162
    %v362 = vunpack.c.h.b16 %v162
    %v363 = vunpack.c.l.b16 %v163
    %v364 = vunpack.c.h.b16 %v163
    %v365 = vunpack.c.l.b16 %v164
    %v366 = vunpack.c.h.b16 %v164
    %v367 = vunpack.c.l.b16 %v165
    %v368 = vunpack.c.h.b16 %v165
    %v369 = vunpack.c.l.b16 %v166
    %v370 = vunpack.c.h.b16 %v166
    %v371 = vunpack.c.l.b16 %v167
    %v372 = vunpack.c.h.b16 %v167
    %v373 = vunpack.c.l.b16 %v168
    %v374 = vunpack.c.h.b16 %v168
    %v375 = vunpack.c.l.b16 %v169
    %v376 = vunpack.c.h.b16 %v169
    %v377 = vunpack.c.l.b16 %v170
    %v378 = vunpack.c.h.b16 %v170
    %v379 = vunpack.c.l.b16 %v171
    %v380 = vunpack.c.h.b16 %v171
    %v381 = vunpack.c.l.b16 %v172
    %v382 = vunpack.c.h.b16 %v172
    %v383 = vunpack.c.l.b16 %v173
    %v384 = vunpack.c.h.b16 %v173
    %v385 = vunpack.c.l.b16 %v174
    %v386 = vunpack.c.h.b16 %v174
    %v387 = vunpack.c.l.b16 %v175
    %v388 = vunpack.c.h.b16 %v175
    %v389 = vunpack.c.l.b16 %v176
    %v390 = vunpack.c.h.b16 %v176
    %v391 = vunpack.c.l.b16 %v177
    %v392 = vunpack.c.h.b16 %v177
    %v393 = vunpack.c.l.b16 %v178
    %v394 = vunpack.c.h.b16 %v178
    %v395 = vunpack.c.l.b16 %v179
    %v396 = vunpack.c.h.b16 %v179
    %v397 = vunpack.c.l.b16 %v180
    %v398 = vunpack.c.h.b16 %v180
    %v399 = vunpack.c.l.b16 %v181
    %v400 = vunpack.c.h.b16 %v181
    %v401 = vunpack.c.l.b16 %v182
    %v402 = vunpack.c.h.b16 %v182
    %v403 = vunpack.c.l.b16 %v183
    %v404 = vunpack.c.h.b16 %v183
    %v405 = vunpack.c.l.b16 %v184
    %v406 = vunpack.c.h.b16 %v184
    %v407 = vunpack.c.l.b16 %v185
    %v408 = vunpack.c.h.b16 %v185
    %v409 = vunpack.c.l.b16 %v186
    %v410 = vunpack.c.h.b16 %v186
    %v411 = vunpack.c.l.b16 %v187
    %v412 = vunpack.c.h.b16 %v187
    %v413 = vunpack.c.l.b16 %v188
    %v414 = vunpack.c.h.b16 %v188
    %v415 = vunpack.c.l.b16 %v189
    %v416 = vunpack.c.h.b16 %v189
    %v417 = vunpack.c.l.b16 %v190
    %v418 = vunpack.c.h.b16 %v190
    %v419 = vunpack.c.l.b16 %v191
    %v420 = vunpack.c.h.b16 %v191
    %v421 = vunpack.c.l.b16 %v192
    %v422 = vunpack.c.h.b16 %v192
    %v423 = vunpack.c.l.b16 %v193
    %v424 = vunpack.c.h.b16 %v193
    %v425 = vunpack.c.l.b16 %v194
    %v426 = vunpack.c.h.b16 %v194
    %v427 = vunpack.c.l.b16 %v195
    %v428 = vunpack.c.h.b16 %v195
    %v429 = vunpack.c.l.b16 %v196
    %v430 = vunpack.c.h.b16 %v196
    %v431 = vunpack.c.l.b16 %v197
    %v432 = vunpack.c.h.b16 %v197
    %v433 = vunpack.c.l.b16 %v198
    %v434 = vunpack.c.h.b16 %v198
    %v435 = vunpack.c.l.b16 %v199
    %v436 = vunpack.c.h.b16 %v199
    %v437 = vunpack.c.l.b16 %v200
    %v438 = vunpack.c.h.b16 %v200
    %v439 = vunpack.c.l.b16 %v201
    %v440 = vunpack.c.h.b16 %v201
    %v441 = vunpack.c.l.b16 %v202
    %v442 = vunpack.c.h.b16 %v202
    %v443 = vunpack.c.l.b16 %v203
    %v444 = vunpack.c.h.b16 %v203
    %v445 = vunpack.c.l.b16 %v204
    %v446 = vunpack.c.h.b16 %v204
    %v447 = vunpack.c.l.b16 %v205
    %v448 = vunpack.c.h.b16 %v205
    %v449 = vunpack.c.l.b16 %v206
    %v450 = vunpack.c.h.b16 %v206
    %v451 = vunpack.c.l.b16 %v207
    %v452 = vunpack.c.h.b16 %v207
    %v453 = vunpack.c.l.b16 %v208
    %v454 = vunpack.c.h.b16 %v208
    %v455 = vunpack.c.l.b16 %v209
    %v456 = vunpack.c.h.b16 %v209
    %v457 = vunpack.c.l.b16 %v210
    %v458 = vunpack.c.h.b16 %v210
    %v459 = vunpack.c.l.b16 %v211
    %v460 = vunpack.c.h.b16 %v211
    %v461 = vunpack.c.l.b16 %v212
    %v462 = vunpack.c.h.b16 %v212
    %v463 = vunpack.c.l.b16 %v213
    %v464 = vunpack.c.h.b16 %v213
    %v465 = vunpack.c.l.b16 %v214
    %v466 = vunpack.c.h.b16 %v214
    %v467 = vunpack.c.l.b16 %v215
    %v468 = vunpack.c.h.b16 %v215
    %v469 = vunpack.c.l.b16 %v216
    %v470 = vunpack.c.h.b16 %v216
    %v471 = vunpack.c.l.b16 %v217
    %v472 = vunpack.c.h.b16 %v217
    %v473 = vunpack.c.l.b16 %v218
    %v474 = vunpack.c.h.b16 %v218
    %v475 = vunpack.c.l.b16 %v219
    %v476 = vunpack.c.h.b16 %v219
    %v477 = vunpack.c.l.b16 %v220
    %v478 = vunpack.c.h.b16 %v220
    %v479 = vunpack.c.l.b16 %v221
    %v480 = vunpack.c.h.b16 %v221
    %v481 = vunpack.c.l.b16 %v222
    %v482 = vunpack.c.h.b16 %v222
    %v483 = vunpack.c.l.b16 %v223
    %v484 = vunpack.c.h.b16 %v223
    %v485 = vunpack.c.l.b16 %v224
    %v486 = vunpack.c.h.b16 %v224
    %v487 = vunpack.c.l.b16 %v225
    %v488 = vunpack.c.h.b16 %v225
    %v489 = vunpack.c.l.b16 %v226
    %v490 = vunpack.c.h.b16 %v226
    %v491 = vunpack.c.l.b16 %v227
    %v492 = vunpack.c.h.b16 %v227
    %v493 = vunpack.c.l.b16 %v228
    %v494 = vunpack.c.h.b16 %v228
    %v495 = vunpack.c.l.b16 %v229
    %v496 = vunpack.c.h.b16 %v229
    %v497 = vunpack.c.l.b16 %v230
    %v498 = vunpack.c.h.b16 %v230
    %v499 = vunpack.c.l.b16 %v231
    %v500 = vunpack.c.h.b16 %v231
    %v501 = vunpack.c.l.b16 %v232
    %v502 = vunpack.c.h.b16 %v232
    %v503 = vunpack.c.l.b16 %v233
    %v504 = vunpack.c.h.b16 %v233
    %v505 = vunpack.c.l.b16 %v234
    %v506 = vunpack.c.h.b16 %v234
    %v507 = vunpack.c.l.b16 %v235
    %v508 = vunpack.c.h.b16 %v235
    %v509 = vunpack.c.l.b16 %v236
    %v510 = vunpack.c.h.b16 %v236
    %v511 = vunpack.c.l.b16 %v237
    %v512 = vunpack.c.h.b16 %v237
    %v513 = vunpack.c.l.b16 %v238
    %v514 = vunpack.c.h.b16 %v238
    %v515 = vunpack.c.l.b16 %v239
    %v516 = vunpack.c.h.b16 %v239
    %v517 = vunpack.c.l.b16 %v240
    %v518 = vunpack.c.h.b16 %v240
    %v519 = vunpack.c.l.b16 %v241
    %v520 = vunpack.c.h.b16 %v241
    %v521 = vunpack.c.l.b16 %v242
    %v522 = vunpack.c.h.b16 %v242
    %v523 = vunpack.c.l.b16 %v243
    %v524 = vunpack.c.h.b16 %v243
    %v525 = vunpack.c.l.b16 %v244
    %v526 = vunpack.c.h.b16 %v244
    %v527 = vunpack.c.l.b16 %v245
    %v528 = vunpack.c.h.b16 %v245
    %v529 = vunpack.c.l.b16 %v246
    %v530 = vunpack.c.h.b16 %v246
    %v531 = vunpack.c.l.b16 %v247
    %v532 = vunpack.c.h.b16 %v247
    %v533 = vunpack.c.l.b16 %v248
    %v534 = vunpack.c.h.b16 %v248
    %v535 = vunpack.c.l.b16 %v249
    %v536 = vunpack.c.h.b16 %v249
    %v537 = vunpack.c.l.b16 %v250
    %v538 = vunpack.c.h.b16 %v250
    %v539 = vpack.c.b16 %v349, %v347
    %v540 = vpack.c.b16 %v350, %v348
    %v541 = vpack.c.b16 %v353, %v351
    %v542 = vpack.c.b16 %v354, %v352
    %v543 = vpack.c.b16 %v357, %v355
    %v544 = vpack.c.b16 %v358, %v356
    %v545 = vpack.c.b16 %v361, %v359
    %v546 = vpack.c.b16 %v362, %v360
    %v547 = vpack.c.b16 %v365, %v363
    %v548 = vpack.c.b16 %v366, %v364
    %v549 = vpack.c.b16 %v369, %v367
    %v550 = vpack.c.b16 %v370, %v368
    %v551 = vpack.c.b16 %v373, %v371
    %v552 = vpack.c.b16 %v374, %v372
    %v553 = vpack.c.b16 %v377, %v375
    %v554 = vpack.c.b16 %v378, %v376
    %v555 = vpack.c.b16 %v381, %v379
    %v556 = vpack.c.b16 %v382, %v380
    %v557 = vpack.c.b16 %v385, %v383
    %v558 = vpack.c.b16 %v386, %v384
    %v559 = vpack.c.b16 %v389, %v387
    %v560 = vpack.c.b16 %v390, %v388
    %v561 = vpack.c.b16 %v393, %v391
    %v562 = vpack.c.b16 %v394, %v392
    %v563 = vpack.c.b16 %v397, %v395
    %v564 = vpack.c.b16 %v398, %v396
    %v565 = vpack.c.b16 %v401, %v399
    %v566 = vpack.c.b16 %v402, %v400
    %v567 = vpack.c.b16 %v405, %v403
    %v568 = vpack.c.b16 %v406, %v404
    %v569 = vpack.c.b16 %v409, %v407
    %v570 = vpack.c.b16 %v410, %v408
    %v571 = vpack.c.b16 %v413, %v411
    %v572 = vpack.c.b16 %v414, %v412
    %v573 = vpack.c.b16 %v417, %v415
    %v574 = vpack.c.b16 %v418, %v416
    %v575 = vpack.c.b16 %v421, %v419
    %v576 = vpack.c.b16 %v422, %v420
    %v577 = vpack.c.b16 %v425, %v423
    %v578 = vpack.c.b16 %v426, %v424
    %v579 = vpack.c.b16 %v429, %v427
    %v580 = vpack.c.b16 %v430, %v428
    %v581 = vpack.c.b16 %v433, %v431
    %v582 = vpack.c.b16 %v434, %v432
    %v583 = vpack.c.b16 %v437, %v435
    %v584 = vpack.c.b16 %v438, %v436
    %v585 = vpack.c.b16 %v441, %v439
    %v586 = vpack.c.b16 %v442, %v440
    %v587 = vpack.c.b16 %v445, %v443
    %v588 = vpack.c.b16 %v446, %v444
    %v589 = vpack.c.b16 %v449, %v447
    %v590 = vpack.c.b16 %v450, %v448
    %v591 = vpack.c.b16 %v453, %v451
    %v592 = vpack.c.b16 %v454, %v452
    %v593 = vpack.c.b16 %v457, %v455
    %v594 = vpack.c.b16 %v458, %v456
    %v595 = vpack.c.b16 %v461, %v459
    %v596 = vpack.c.b16 %v462, %v460
    %v597 = vpack.c.b16 %v465, %v463
    %v598 = vpack.c.b16 %v466, %v464
    %v599 = vpack.c.b16 %v469, %v467
    %v600 = vpack.c.b16 %v470, %v468
    %v601 = vpack.c.b16 %v473, %v471
    %v602 = vpack.c.b16 %v474, %v472
    %v603 = vpack.c.b16 %v477, %v475
    %v604 = vpack.c.b16 %v478, %v476
    %v605 = vpack.c.b16 %v481, %v479
    %v606 = vpack.c.b16 %v482, %v480
    %v607 = vpack.c.b16 %v485, %v483
    %v608 = vpack.c.b16 %v486, %v484
    %v609 = vpack.c.b16 %v489, %v487
    %v610 = vpack.c.b16 %v490, %v488
    %v611 = vpack.c.b16 %v493, %v491
    %v612 = vpack.c.b16 %v494, %v492
    %v613 = vpack.c.b16 %v497, %v495
    %v614 = vpack.c.b16 %v498, %v496
    %v615 = vpack.c.b16 %v501, %v499
    %v616 = vpack.c.b16 %v502, %v500
    %v617 = vpack.c.b16 %v505, %v503
    %v618 = vpack.c.b16 %v506, %v504
    %v619 = vpack.c.b16 %v509, %v507
    %v620 = vpack.c.b16 %v510, %v508
    %v621 = vpack.c.b16 %v513, %v511
    %v622 = vpack.c.b16 %v514, %v512
    %v623 = vpack.c.b16 %v517, %v515
    %v624 = vpack.c.b16 %v518, %v516
    %v625 = vpack.c.b16 %v521, %v519
    %v626 = vpack.c.b16 %v522, %v520
    %v627 = vpack.c.b16 %v525, %v523
    %v628 = vpack.c.b16 %v526, %v524
    %v629 = vpack.c.b16 %v529, %v527
    %v630 = vpack.c.b16 %v530, %v528
    %v631 = vpack.c.b16 %v533, %v531
    %v632 = vpack.c.b16 %v534, %v532
    %v633 = vpack.c.b16 %v537, %v535
    %v634 = vpack.c.b16 %v538, %v536
    %731 = vmatpush.bf16.msra.mxu0 %v553
    %732 = vmatpush.bf16.msra.mxu0 %v551
    %733 = vmatpush.bf16.msra.mxu0 %v549
    %734 = vmatpush.bf16.msra.mxu0 %v547
    %735 = vmatpush.bf16.msra.mxu0 %v545
    %736 = vmatpush.bf16.msra.mxu0 %v543
    %737 = vmatpush.bf16.msra.mxu0 %v541
    %738 = vmatpush.bf16.msra.mxu0 %v539
    %739 = vmatmul.bf16.gmra.mxu0 %v145
    %v740 = vpop.f32.mrf.mxu0
    %v741 = vadd.f32 0.0, %v740
    %v742 = vpop.f32.mrf.mxu0
    %v743 = vadd.f32 0.0, %v742
    %744 = vdwg.mxu0
    %745 = vmatpush.bf16.msra.mxu0 %v569
    %746 = vmatpush.bf16.msra.mxu0 %v567
    %747 = vmatpush.bf16.msra.mxu0 %v565
    %748 = vmatpush.bf16.msra.mxu0 %v563
    %749 = vmatpush.bf16.msra.mxu0 %v561
    %750 = vmatpush.bf16.msra.mxu0 %v559
    %751 = vmatpush.bf16.msra.mxu0 %v557
    %752 = vmatpush.bf16.msra.mxu0 %v555
    %753 = vmatmul.bf16.gmra.mxu0 %v146
    %v754 = vpop.f32.mrf.mxu0
    %v755 = vadd.f32 %v741, %v754
    %v756 = vpop.f32.mrf.mxu0
    %v757 = vadd.f32 %v743, %v756
    %758 = vdwg.mxu0
    %759 = vmatpush.bf16.msra.mxu0 %v585
    %760 = vmatpush.bf16.msra.mxu0 %v583
    %761 = vmatpush.bf16.msra.mxu0 %v581
    %762 = vmatpush.bf16.msra.mxu0 %v579
    %763 = vmatpush.bf16.msra.mxu0 %v577
    %764 = vmatpush.bf16.msra.mxu0 %v575
    %765 = vmatpush.bf16.msra.mxu0 %v573
    %766 = vmatpush.bf16.msra.mxu0 %v571
    %767 = vmatmul.bf16.gmra.mxu0 %v147
    %v768 = vpop.f32.mrf.mxu0
    %v769 = vadd.f32 %v755, %v768
    %v770 = vpop.f32.mrf.mxu0
    %v771 = vadd.f32 %v757, %v770
    %772 = vdwg.mxu0
    %773 = vmatpush.bf16.msra.mxu0 %v601
    %774 = vmatpush.bf16.msra.mxu0 %v599
    %775 = vmatpush.bf16.msra.mxu0 %v597
    %776 = vmatpush.bf16.msra.mxu0 %v595
    %777 = vmatpush.bf16.msra.mxu0 %v593
    %778 = vmatpush.bf16.msra.mxu0 %v591
    %779 = vmatpush.bf16.msra.mxu0 %v589
    %780 = vmatpush.bf16.msra.mxu0 %v587
    %781 = vmatmul.bf16.gmra.mxu0 %v148
    %v782 = vpop.f32.mrf.mxu0
    %v783 = vadd.f32 %v769, %v782
    %v784 = vpop.f32.mrf.mxu0
    %v785 = vadd.f32 %v771, %v784
    %786 = vdwg.mxu0
    %787 = vmatpush.bf16.msra.mxu0 %v617
    %788 = vmatpush.bf16.msra.mxu0 %v615
    %789 = vmatpush.bf16.msra.mxu0 %v613
    %790 = vmatpush.bf16.msra.mxu0 %v611
    %791 = vmatpush.bf16.msra.mxu0 %v609
    %792 = vmatpush.bf16.msra.mxu0 %v607
    %793 = vmatpush.bf16.msra.mxu0 %v605
    %794 = vmatpush.bf16.msra.mxu0 %v603
    %795 = vmatmul.bf16.gmra.mxu0 %v149
    %v796 = vpop.f32.mrf.mxu0
    %v797 = vadd.f32 %v783, %v796
    %v798 = vpop.f32.mrf.mxu0
    %v799 = vadd.f32 %v785, %v798
    %800 = vdwg.mxu0
    %801 = vmatpush.bf16.msra.mxu0 %v633
    %802 = vmatpush.bf16.msra.mxu0 %v631
    %803 = vmatpush.bf16.msra.mxu0 %v629
    %804 = vmatpush.bf16.msra.mxu0 %v627
    %805 = vmatpush.bf16.msra.mxu0 %v625
    %806 = vmatpush.bf16.msra.mxu0 %v623
    %807 = vmatpush.bf16.msra.mxu0 %v621
    %808 = vmatpush.bf16.msra.mxu0 %v619
    %809 = vmatmul.bf16.gmra.mxu0 %v150
    %v810 = vpop.f32.mrf.mxu0
    %v811 = vadd.f32 %v797, %v810
    %v812 = vpop.f32.mrf.mxu0
    %v813 = vadd.f32 %v799, %v812
    %814 = vdwg.mxu0
    %815 = vmatpush.bf16.msra.mxu0 %v554
    %816 = vmatpush.bf16.msra.mxu0 %v552
    %817 = vmatpush.bf16.msra.mxu0 %v550
    %818 = vmatpush.bf16.msra.mxu0 %v548
    %819 = vmatpush.bf16.msra.mxu0 %v546
    %820 = vmatpush.bf16.msra.mxu0 %v544
    %821 = vmatpush.bf16.msra.mxu0 %v542
    %822 = vmatpush.bf16.msra.mxu0 %v540
    %823 = vmatmul.bf16.gmra.mxu0 %v145
    %v824 = vpop.f32.mrf.mxu0
    %v825 = vadd.f32 0.0, %v824
    %v826 = vpop.f32.mrf.mxu0
    %v827 = vadd.f32 0.0, %v826
    %828 = vdwg.mxu0
    %829 = vmatpush.bf16.msra.mxu0 %v570
    %830 = vmatpush.bf16.msra.mxu0 %v568
    %831 = vmatpush.bf16.msra.mxu0 %v566
    %832 = vmatpush.bf16.msra.mxu0 %v564
    %833 = vmatpush.bf16.msra.mxu0 %v562
    %834 = vmatpush.bf16.msra.mxu0 %v560
    %835 = vmatpush.bf16.msra.mxu0 %v558
    %836 = vmatpush.bf16.msra.mxu0 %v556
    %837 = vmatmul.bf16.gmra.mxu0 %v146
    %v838 = vpop.f32.mrf.mxu0
    %v839 = vadd.f32 %v825, %v838
    %v840 = vpop.f32.mrf.mxu0
    %v841 = vadd.f32 %v827, %v840
    %842 = vdwg.mxu0
    %843 = vmatpush.bf16.msra.mxu0 %v586
    %844 = vmatpush.bf16.msra.mxu0 %v584
    %845 = vmatpush.bf16.msra.mxu0 %v582
    %846 = vmatpush.bf16.msra.mxu0 %v580
    %847 = vmatpush.bf16.msra.mxu0 %v578
    %848 = vmatpush.bf16.msra.mxu0 %v576
    %849 = vmatpush.bf16.msra.mxu0 %v574
    %850 = vmatpush.bf16.msra.mxu0 %v572
    %851 = vmatmul.bf16.gmra.mxu0 %v147
    %v852 = vpop.f32.mrf.mxu0
    %v853 = vadd.f32 %v839, %v852
    %v854 = vpop.f32.mrf.mxu0
    %v855 = vadd.f32 %v841, %v854
    %856 = vdwg.mxu0
    %857 = vmatpush.bf16.msra.mxu0 %v602
    %858 = vmatpush.bf16.msra.mxu0 %v600
    %859 = vmatpush.bf16.msra.mxu0 %v598
    %860 = vmatpush.bf16.msra.mxu0 %v596
    %861 = vmatpush.bf16.msra.mxu0 %v594
    %862 = vmatpush.bf16.msra.mxu0 %v592
    %863 = vmatpush.bf16.msra.mxu0 %v590
    %864 = vmatpush.bf16.msra.mxu0 %v588
    %865 = vmatmul.bf16.gmra.mxu0 %v148
    %v866 = vpop.f32.mrf.mxu0
    %v867 = vadd.f32 %v853, %v866
    %v868 = vpop.f32.mrf.mxu0
    %v869 = vadd.f32 %v855, %v868
    %870 = vdwg.mxu0
    %871 = vmatpush.bf16.msra.mxu0 %v618
    %872 = vmatpush.bf16.msra.mxu0 %v616
    %873 = vmatpush.bf16.msra.mxu0 %v614
    %874 = vmatpush.bf16.msra.mxu0 %v612
    %875 = vmatpush.bf16.msra.mxu0 %v610
    %876 = vmatpush.bf16.msra.mxu0 %v608
    %877 = vmatpush.bf16.msra.mxu0 %v606
    %878 = vmatpush.bf16.msra.mxu0 %v604
    %879 = vmatmul.bf16.gmra.mxu0 %v149
    %v880 = vpop.f32.mrf.mxu0
    %v881 = vadd.f32 %v867, %v880
    %v882 = vpop.f32.mrf.mxu0
    %v883 = vadd.f32 %v869, %v882
    %884 = vdwg.mxu0
    %885 = vmatpush.bf16.msra.mxu0 %v634
    %886 = vmatpush.bf16.msra.mxu0 %v632
    %887 = vmatpush.bf16.msra.mxu0 %v630
    %888 = vmatpush.bf16.msra.mxu0 %v628
    %889 = vmatpush.bf16.msra.mxu0 %v626
    %890 = vmatpush.bf16.msra.mxu0 %v624
    %891 = vmatpush.bf16.msra.mxu0 %v622
    %892 = vmatpush.bf16.msra.mxu0 %v620
    %893 = vmatmul.bf16.gmra.mxu0 %v150
    %v894 = vpop.f32.mrf.mxu0
    %v895 = vadd.f32 %v881, %v894
    %v896 = vpop.f32.mrf.mxu0
    %v897 = vadd.f32 %v883, %v896
    %898 = vdwg.mxu0
    %v899 = vadd.f32 %v151, %v811
    %v900 = vadd.f32 %v152, %v895
    %v901 = vadd.f32 %v153, %v813
    %v902 = vadd.f32 %v154, %v897
    %903 = vst [vmem:[#allocation2] sm:$0xff] %v899
    %904 = vst [vmem:[#allocation2 + $0x8] sm:$0xff] %v900
    %905 = vst [vmem:[#allocation2 + $0x10] sm:$0xff] %v901
    %906 = vst [vmem:[#allocation2 + $0x18] sm:$0xff] %v902
    // Predicated region
    $region66: #{tpu_custom_call.1} parent=1 // pred_check
      %p907 = pneg %p125
    $region67: #{tpu_custom_call.1} parent=1 // pred_check_branch
      %909 = sbr.rel (%p907) target = $region69
    $region68: #{tpu_custom_call.1} parent=1 // pred_region
      %v910 = vld [vmem:[#allocation2] sm:$0xff]
      %v911 = vld [vmem:[#allocation2 + $0x8] sm:$0xff]
      %v912 = vld [vmem:[#allocation2 + $0x10] sm:$0xff]
      %v913 = vld [vmem:[#allocation2 + $0x18] sm:$0xff]
      %v914 = vld [vmem:[#allocation8] sm:$0x3]
      %v916 = vperm.slane %v914, 0
      %v917 = vperm.slane %v914, 1
      %v920 = vadd.f32 %v910, %v916
      %v921 = vadd.f32 %v911, %v917
      %v922 = vadd.f32 %v912, %v916
      %v923 = vadd.f32 %v913, %v917
      %vm924 = vcmp.gt.f32.partialorder %v920, 0.0
      %vm925 = vcmp.gt.f32.partialorder %v921, 0.0
      %vm926 = vcmp.gt.f32.partialorder %v922, 0.0
      %vm927 = vcmp.gt.f32.partialorder %v923, 0.0
      %v928 = vmul.f32 %v920, 0.2
      %v929 = vmul.f32 %v921, 0.2
      %v930 = vmul.f32 %v922, 0.2
      %v931 = vmul.f32 %v923, 0.2
      %v932 = vsel %vm924, %v920, %v928
      %v933 = vsel %vm925, %v921, %v929
      %v934 = vsel %vm926, %v922, %v930
      %v935 = vsel %vm927, %v923, %v931
      %v936 = vpack.c.bf16 %v934, %v932
      %v937 = vpack.c.bf16 %v935, %v933
      %v938 = vld [vmem:[#allocation9] sm:$0xf]
      %v939 = vld [vmem:[#allocation9 + $0x4] sm:$0xf]
      %v940 = vld [vmem:[#allocation9 + $0x8] sm:$0xf]
      %v941 = vld [vmem:[#allocation9 + $0xc] sm:$0xf]
      %v942 = vld [vmem:[#allocation9 + $0x10] sm:$0xf]
      %v943 = vld [vmem:[#allocation9 + $0x14] sm:$0xf]
      %v944 = vld [vmem:[#allocation9 + $0x18] sm:$0xf]
      %v945 = vld [vmem:[#allocation9 + $0x1c] sm:$0xf]
      %v946 = vld [vmem:[#allocation9 + $0x20] sm:$0xf]
      %v947 = vld [vmem:[#allocation9 + $0x24] sm:$0xf]
      %v948 = vld [vmem:[#allocation9 + $0x28] sm:$0xf]
      %v949 = vld [vmem:[#allocation9 + $0x2c] sm:$0xf]
      %v950 = vld [vmem:[#allocation9 + $0x30] sm:$0xf]
      %v951 = vld [vmem:[#allocation9 + $0x34] sm:$0xf]
      %v952 = vld [vmem:[#allocation9 + $0x38] sm:$0xf]
      %v953 = vld [vmem:[#allocation9 + $0x3c] sm:$0xf]
      %v954 = vld [vmem:[#allocation9 + $0x40] sm:$0xf]
      %v955 = vld [vmem:[#allocation9 + $0x44] sm:$0xf]
      %v956 = vld [vmem:[#allocation9 + $0x48] sm:$0xf]
      %v957 = vld [vmem:[#allocation9 + $0x4c] sm:$0xf]
      %v958 = vld [vmem:[#allocation9 + $0x50] sm:$0xf]
      %v959 = vld [vmem:[#allocation9 + $0x54] sm:$0xf]
      %v960 = vld [vmem:[#allocation9 + $0x58] sm:$0xf]
      %v961 = vld [vmem:[#allocation9 + $0x5c] sm:$0xf]
      %v962 = vld [vmem:[#allocation9 + $0x60] sm:$0xf]
      %v963 = vld [vmem:[#allocation9 + $0x64] sm:$0xf]
      %v964 = vld [vmem:[#allocation9 + $0x68] sm:$0xf]
      %v965 = vld [vmem:[#allocation9 + $0x6c] sm:$0xf]
      %v966 = vld [vmem:[#allocation9 + $0x70] sm:$0xf]
      %v967 = vld [vmem:[#allocation9 + $0x74] sm:$0xf]
      %v968 = vld [vmem:[#allocation9 + $0x78] sm:$0xf]
      %v969 = vld [vmem:[#allocation9 + $0x7c] sm:$0xf]
      %v970 = vld [vmem:[%s4] sm:$0x1]
      %v972 = vperm.slane %v970, 0
      %v1006 = vunpack.c.l.b16 %v938
      %v1007 = vunpack.c.l.b16 %v939
      %v1008 = vunpack.c.l.b16 %v940
      %v1009 = vunpack.c.l.b16 %v941
      %v1010 = vunpack.c.l.b16 %v942
      %v1011 = vunpack.c.l.b16 %v943
      %v1012 = vunpack.c.l.b16 %v944
      %v1013 = vunpack.c.l.b16 %v945
      %v1014 = vunpack.c.l.b16 %v946
      %v1015 = vunpack.c.l.b16 %v947
      %v1016 = vunpack.c.l.b16 %v948
      %v1017 = vunpack.c.l.b16 %v949
      %v1018 = vunpack.c.l.b16 %v950
      %v1019 = vunpack.c.l.b16 %v951
      %v1020 = vunpack.c.l.b16 %v952
      %v1021 = vunpack.c.l.b16 %v953
      %v1022 = vunpack.c.l.b16 %v954
      %v1023 = vunpack.c.l.b16 %v955
      %v1024 = vunpack.c.l.b16 %v956
      %v1025 = vunpack.c.l.b16 %v957
      %v1026 = vunpack.c.l.b16 %v958
      %v1027 = vunpack.c.l.b16 %v959
      %v1028 = vunpack.c.l.b16 %v960
      %v1029 = vunpack.c.l.b16 %v961
      %v1030 = vunpack.c.l.b16 %v962
      %v1031 = vunpack.c.l.b16 %v963
      %v1032 = vunpack.c.l.b16 %v964
      %v1033 = vunpack.c.l.b16 %v965
      %v1034 = vunpack.c.l.b16 %v966
      %v1035 = vunpack.c.l.b16 %v967
      %v1036 = vunpack.c.l.b16 %v968
      %v1037 = vunpack.c.l.b16 %v969
      %v1038 = vpack.c.b16 %v1007, %v1006
      %v1039 = vpack.c.b16 %v1009, %v1008
      %v1040 = vpack.c.b16 %v1011, %v1010
      %v1041 = vpack.c.b16 %v1013, %v1012
      %v1042 = vpack.c.b16 %v1015, %v1014
      %v1043 = vpack.c.b16 %v1017, %v1016
      %v1044 = vpack.c.b16 %v1019, %v1018
      %v1045 = vpack.c.b16 %v1021, %v1020
      %v1046 = vpack.c.b16 %v1023, %v1022
      %v1047 = vpack.c.b16 %v1025, %v1024
      %v1048 = vpack.c.b16 %v1027, %v1026
      %v1049 = vpack.c.b16 %v1029, %v1028
      %v1050 = vpack.c.b16 %v1031, %v1030
      %v1051 = vpack.c.b16 %v1033, %v1032
      %v1052 = vpack.c.b16 %v1035, %v1034
      %v1053 = vpack.c.b16 %v1037, %v1036
      %1070 = vmatpush.bf16.msra.mxu0 %v1045
      %1071 = vmatpush.bf16.msra.mxu0 %v1044
      %1072 = vmatpush.bf16.msra.mxu0 %v1043
      %1073 = vmatpush.bf16.msra.mxu0 %v1042
      %1074 = vmatpush.bf16.msra.mxu0 %v1041
      %1075 = vmatpush.bf16.msra.mxu0 %v1040
      %1076 = vmatpush.bf16.msra.mxu0 %v1039
      %1077 = vmatpush.bf16.msra.mxu0 %v1038
      %1078 = vmatmul.bf16.gmra.mxu0 %v936
      %v1079 = vpop.f32.mrf.mxu0
      %v1080 = vadd.f32 %v972, %v1079
      %v1081 = vpop.f32.mrf.mxu0
      %v1082 = vadd.f32 %v972, %v1081
      %1083 = vdwg.mxu0
      %1084 = vmatpush.bf16.msra.mxu0 %v1053
      %1085 = vmatpush.bf16.msra.mxu0 %v1052
      %1086 = vmatpush.bf16.msra.mxu0 %v1051
      %1087 = vmatpush.bf16.msra.mxu0 %v1050
      %1088 = vmatpush.bf16.msra.mxu0 %v1049
      %1089 = vmatpush.bf16.msra.mxu0 %v1048
      %1090 = vmatpush.bf16.msra.mxu0 %v1047
      %1091 = vmatpush.bf16.msra.mxu0 %v1046
      %1092 = vmatmul.bf16.gmra.mxu0 %v937
      %v1093 = vpop.f32.mrf.mxu0
      %v1094 = vadd.f32 %v1080, %v1093
      %v1095 = vpop.f32.mrf.mxu0
      %v1096 = vadd.f32 %v1082, %v1095
      %1097 = vdwg.mxu0
      %vm1098 = vcmp.gt.f32.partialorder %v1094, 0.0
      %vm1099 = vcmp.gt.f32.partialorder %v1096, 0.0
      %v1100 = vmul.f32 %v1094, 0.2
      %v1101 = vmul.f32 %v1096, 0.2
      %v1102 = vsel %vm1098, %v1094, %v1100
      %v1103 = vsel %vm1099, %v1096, %v1101
      %v1104 = vpack.c.bf16 %v1103, %v1102
      %v1105 = vld [vmem:[#allocation11] sm:$0xf]
      %v1106 = vld [vmem:[#allocation11 + $0x4] sm:$0xf]
      %v1107 = vld [vmem:[#allocation11 + $0x8] sm:$0xf]
      %v1108 = vld [vmem:[#allocation11 + $0xc] sm:$0xf]
      %v1109 = vld [vmem:[#allocation11 + $0x10] sm:$0xf]
      %v1110 = vld [vmem:[#allocation11 + $0x14] sm:$0xf]
      %v1111 = vld [vmem:[#allocation11 + $0x18] sm:$0xf]
      %v1112 = vld [vmem:[#allocation11 + $0x1c] sm:$0xf]
      %v1113 = vld [vmem:[#allocation11 + $0x20] sm:$0xf]
      %v1114 = vld [vmem:[#allocation11 + $0x24] sm:$0xf]
      %v1115 = vld [vmem:[#allocation11 + $0x28] sm:$0xf]
      %v1116 = vld [vmem:[#allocation11 + $0x2c] sm:$0xf]
      %v1117 = vld [vmem:[#allocation11 + $0x30] sm:$0xf]
      %v1118 = vld [vmem:[#allocation11 + $0x34] sm:$0xf]
      %v1119 = vld [vmem:[#allocation11 + $0x38] sm:$0xf]
      %v1120 = vld [vmem:[#allocation11 + $0x3c] sm:$0xf]
      %v1121 = vld [vmem:[%s6] sm:$0x1]
      %v1123 = vperm.slane %v1121, 0
      %v1141 = vunpack.c.l.b16 %v1105
      %v1142 = vunpack.c.l.b16 %v1106
      %v1143 = vunpack.c.l.b16 %v1107
      %v1144 = vunpack.c.l.b16 %v1108
      %v1145 = vunpack.c.l.b16 %v1109
      %v1146 = vunpack.c.l.b16 %v1110
      %v1147 = vunpack.c.l.b16 %v1111
      %v1148 = vunpack.c.l.b16 %v1112
      %v1149 = vunpack.c.l.b16 %v1113
      %v1150 = vunpack.c.l.b16 %v1114
      %v1151 = vunpack.c.l.b16 %v1115
      %v1152 = vunpack.c.l.b16 %v1116
      %v1153 = vunpack.c.l.b16 %v1117
      %v1154 = vunpack.c.l.b16 %v1118
      %v1155 = vunpack.c.l.b16 %v1119
      %v1156 = vunpack.c.l.b16 %v1120
      %v1157 = vpack.c.b16 %v1142, %v1141
      %v1158 = vpack.c.b16 %v1144, %v1143
      %v1159 = vpack.c.b16 %v1146, %v1145
      %v1160 = vpack.c.b16 %v1148, %v1147
      %v1161 = vpack.c.b16 %v1150, %v1149
      %v1162 = vpack.c.b16 %v1152, %v1151
      %v1163 = vpack.c.b16 %v1154, %v1153
      %v1164 = vpack.c.b16 %v1156, %v1155
      %1173 = vmatpush.bf16.msra.mxu0 %v1164
      %1174 = vmatpush.bf16.msra.mxu0 %v1163
      %1175 = vmatpush.bf16.msra.mxu0 %v1162
      %1176 = vmatpush.bf16.msra.mxu0 %v1161
      %1177 = vmatpush.bf16.msra.mxu0 %v1160
      %1178 = vmatpush.bf16.msra.mxu0 %v1159
      %1179 = vmatpush.bf16.msra.mxu0 %v1158
      %1180 = vmatpush.bf16.msra.mxu0 %v1157
      %1181 = vmatmul.bf16.gmra.mxu0 %v1104
      %v1182 = vpop.f32.mrf.mxu0
      %v1183 = vadd.f32 %v1123, %v1182
      %v1184 = vpop.f32.mrf.mxu0
      %v1185 = vadd.f32 %v1123, %v1184
      %1186 = vdwg.mxu0
      %vm1187 = vcmp.gt.f32.partialorder %v1183, 0.0
      %vm1188 = vcmp.gt.f32.partialorder %v1185, 0.0
      %v1189 = vmul.f32 %v1183, 0.2
      %v1190 = vmul.f32 %v1185, 0.2
      %v1191 = vsel %vm1187, %v1183, %v1189
      %v1192 = vsel %vm1188, %v1185, %v1190
      %v1193 = vpack.c.bf16 %v1192, %v1191
      %v1194 = vld [vmem:[#allocation12] sm:$0xf]
      %v1195 = vld [vmem:[#allocation12 + $0x4] sm:$0xf]
      %v1196 = vld [vmem:[#allocation12 + $0x8] sm:$0xf]
      %v1197 = vld [vmem:[#allocation12 + $0xc] sm:$0xf]
      %v1198 = vld [vmem:[#allocation12 + $0x10] sm:$0xf]
      %v1199 = vld [vmem:[#allocation12 + $0x14] sm:$0xf]
      %v1200 = vld [vmem:[#allocation12 + $0x18] sm:$0xf]
      %v1201 = vld [vmem:[#allocation12 + $0x1c] sm:$0xf]
      %v1202 = vld [vmem:[#allocation12 + $0x20] sm:$0xf]
      %v1203 = vld [vmem:[#allocation12 + $0x24] sm:$0xf]
      %v1204 = vld [vmem:[#allocation12 + $0x28] sm:$0xf]
      %v1205 = vld [vmem:[#allocation12 + $0x2c] sm:$0xf]
      %v1206 = vld [vmem:[#allocation12 + $0x30] sm:$0xf]
      %v1207 = vld [vmem:[#allocation12 + $0x34] sm:$0xf]
      %v1208 = vld [vmem:[#allocation12 + $0x38] sm:$0xf]
      %v1209 = vld [vmem:[#allocation12 + $0x3c] sm:$0xf]
      %v1210 = vld [vmem:[%s8] sm:$0x1]
      %v1212 = vperm.slane %v1210, 0
      %v1230 = vunpack.c.l.b16 %v1194
      %v1231 = vunpack.c.l.b16 %v1195
      %v1232 = vunpack.c.l.b16 %v1196
      %v1233 = vunpack.c.l.b16 %v1197
      %v1234 = vunpack.c.l.b16 %v1198
      %v1235 = vunpack.c.l.b16 %v1199
      %v1236 = vunpack.c.l.b16 %v1200
      %v1237 = vunpack.c.l.b16 %v1201
      %v1238 = vunpack.c.l.b16 %v1202
      %v1239 = vunpack.c.l.b16 %v1203
      %v1240 = vunpack.c.l.b16 %v1204
      %v1241 = vunpack.c.l.b16 %v1205
      %v1242 = vunpack.c.l.b16 %v1206
      %v1243 = vunpack.c.l.b16 %v1207
      %v1244 = vunpack.c.l.b16 %v1208
      %v1245 = vunpack.c.l.b16 %v1209
      %v1246 = vpack.c.b16 %v1231, %v1230
      %v1247 = vpack.c.b16 %v1233, %v1232
      %v1248 = vpack.c.b16 %v1235, %v1234
      %v1249 = vpack.c.b16 %v1237, %v1236
      %v1250 = vpack.c.b16 %v1239, %v1238
      %v1251 = vpack.c.b16 %v1241, %v1240
      %v1252 = vpack.c.b16 %v1243, %v1242
      %v1253 = vpack.c.b16 %v1245, %v1244
      %1262 = vmatpush.bf16.msra.mxu0 %v1253
      %1263 = vmatpush.bf16.msra.mxu0 %v1252
      %1264 = vmatpush.bf16.msra.mxu0 %v1251
      %1265 = vmatpush.bf16.msra.mxu0 %v1250
      %1266 = vmatpush.bf16.msra.mxu0 %v1249
      %1267 = vmatpush.bf16.msra.mxu0 %v1248
      %1268 = vmatpush.bf16.msra.mxu0 %v1247
      %1269 = vmatpush.bf16.msra.mxu0 %v1246
      %1270 = vmatmul.bf16.gmra.mxu0 %v1193
      %v1271 = vpop.f32.mrf.mxu0
      %v1272 = vadd.f32 %v1212, %v1271
      %v1273 = vpop.f32.mrf.mxu0
      %v1274 = vadd.f32 %v1212, %v1273
      %1275 = vdwg.mxu0
      %v1276 = vsub.f32 0.0, %v1272
      %v1277 = vsub.f32 0.0, %v1274
      %v1278 = vmul.f32 %v1276, 1.442695
      %v1279 = vpow.pop %v1278
      %v1280 = vmul.f32 %v1277, 1.442695
      %v1281 = vpow.pop %v1280
      %v1282 = vadd.f32 %v1279, 1.0
      %v1283 = vadd.f32 %v1281, 1.0
      %v1284 = vrcp.pop %v1282
      %v1285 = vmul.f32 %v1282, %v1284
      %v1286 = vsub.f32 1.0, %v1285
      %v1287 = vmul.f32 %v1284, %v1286
      %v1288 = vadd.f32 %v1284, %v1287
      %vm1289 = vweird.f32 %v1282
      %vm1290 = vweird.f32 %v1284
      %vm1291 = vmor %vm1289, %vm1290
      %v1292 = vsel %vm1291, %v1284, %v1288
      %v1293 = vand.u32 2147483647, %v1282
      %vm1294 = vcmp.eq.f32.partialorder %v1293, 8.507059e+37
      %v1295 = vand.u32 %v1282, 2147483648
      %v1296 = vor.u32 1.1754944e-38, %v1295
      %v1297 = vsel %vm1294, %v1296, %v1292
      %v1298 = vrcp.pop %v1283
      %v1299 = vmul.f32 %v1283, %v1298
      %v1300 = vsub.f32 1.0, %v1299
      %v1301 = vmul.f32 %v1298, %v1300
      %v1302 = vadd.f32 %v1298, %v1301
      %vm1303 = vweird.f32 %v1283
      %vm1304 = vweird.f32 %v1298
      %vm1305 = vmor %vm1303, %vm1304
      %v1306 = vsel %vm1305, %v1298, %v1302
      %v1307 = vand.u32 2147483647, %v1283
      %vm1308 = vcmp.eq.f32.partialorder %v1307, 8.507059e+37
      %v1309 = vand.u32 %v1283, 2147483648
      %v1310 = vor.u32 1.1754944e-38, %v1309
      %v1311 = vsel %vm1308, %v1310, %v1306
      %1312 = vst [vmem:[#allocation14] sm:$0xff] %v1297
      %1313 = vst [vmem:[#allocation14 + $0x8] sm:$0xff] %v1311
    $region69: #{tpu_custom_call.1} parent=1 // pred_fallthru
      _
    // Predicated region
    $region70: #{tpu_custom_call.1} parent=1 // pred_check
      _
    $region71: #{tpu_custom_call.1} parent=1 // pred_check_branch
      %1315 = sbr.rel (0) target = $region73
    $region72: #{tpu_custom_call.1} parent=1 // pred_region
      %1317 = vsyncadd [#allocation5], 0
      %s1318 = sshll.u32 [#allocation14], 4
      %s1319 = int_to_ptr.vmem [resolvable:$true] %s1318
      %s1320 = sshll.u32 %s9, 4
      %s1321 = int_to_ptr.hbm [resolvable:$true] %s1320
      %1326 = dma.vmem_to_hbm [thread:$0]  %s1319, 256, %s1321, [#allocation5], 128, 128, 8
    $region73: #{tpu_custom_call.1} parent=1 // pred_fallthru
      _
    // Predicated region
    $region74: #{tpu_custom_call.1} parent=1 // pred_check
      _
    $region75: #{tpu_custom_call.1} parent=1 // pred_check_branch
      %1328 = sbr.rel (0) target = $region77
    $region76: #{tpu_custom_call.1} parent=1 // pred_region
      %1330 = dma.done [#allocation5], 256
    $region77: #{tpu_custom_call.1} parent=1 // pred_fallthru
      _
    %1331 = vsyncpa [#allocation4], 1
    %1332 = vsyncpa [#allocation7], 1
    %1333 = vsyncpa [#allocation10], 1
    %1334 = vsyncpa [#allocation13], 1
    %1335 = vsyncpa [#allocation5], 1

</llo_original>
